<compile_context>
chip_gen: v6e
topology: v6e:2x2x1
jax: 0.10.0
libtpu: 0.0.40
codegen_flags: <defaults>
</compile_context>

<pallas_src>
import jax
import jax.numpy as jnp
from jax.experimental import pallas as pl
from jax.experimental.pallas import tpu as pltpu

IN_DIM = 512
CODE_DIM = 16

# Large M tile to amortize the ~0.35us per-grid-step cost (important on v7x's
# 3.2 TB/s HBM where a 1024-row f32 tile is only ~1.3us of traffic).
DEFAULT_TM = 2048


def _round_up(n, m):
    return ((n + m - 1) // m) * m


def _make_kernel(mxu_dtype):
    def kernel(x_ref, enc_ref, dec_ref, xe_ref, y_ref):
        x = x_ref[...]                      # (tm, 512)
        enc = enc_ref[...]                  # (512, 16)  resident across grid
        dec = dec_ref[...]                  # (16, 512)  resident across grid
        # First dot: bf16 multiplicands, f32 accumulate.
        xe = jnp.dot(
            x.astype(mxu_dtype), enc.astype(mxu_dtype),
            preferred_element_type=jnp.float32,
        )                                   # (tm, 16) f32
        xe_ref[...] = xe.astype(xe_ref.dtype)
        # Second dot reuses the in-register f32 xe (cast per-op, f32 accumulate).
        y = jnp.dot(
            xe.astype(mxu_dtype), dec.astype(mxu_dtype),
            preferred_element_type=jnp.float32,
        )                                   # (tm, 512) f32
        y_ref[...] = y.astype(y_ref.dtype)
    return kernel


def encoder_decoder(x, encoder, decoder, *, tm=DEFAULT_TM, mxu_bf16=True):
    """Returns (x @ encoder, (x @ encoder) @ decoder), matching the PyTorch module."""
    M, K = x.shape
    assert K == IN_DIM and encoder.shape == (IN_DIM, CODE_DIM)
    assert decoder.shape == (CODE_DIM, IN_DIM)

    out_dtype = x.dtype
    itemsize = jnp.dtype(out_dtype).itemsize
    # Sublane granularity: 8 for 4-byte dtypes, 16 for 2-byte (bf16) inputs.
    sub = 8 if itemsize >= 4 else 16

    # Effective tile: never much larger than M, multiple of the sublane size.
    tm_eff = min(tm, _round_up(M, sub))
    tm_eff = max(sub, (tm_eff // sub) * sub)

    # No wrapper-side padding: ragged last block handled by Pallas masking.
    grid = (pl.cdiv(M, tm_eff),)

    mxu_dtype = jnp.bfloat16 if mxu_bf16 else jnp.float32
    kernel = _make_kernel(mxu_dtype)

    # Lane-padded VMEM accounting (minor dims pad to 128 in VMEM), x2 buffers.
    def lane(n):
        return _round_up(n, 128)
    x_tile_b = tm_eff * IN_DIM * jnp.dtype(x.dtype).itemsize
    y_tile_b = tm_eff * IN_DIM * itemsize
    xe_tile_b = tm_eff * lane(CODE_DIM) * itemsize
    enc_b = IN_DIM * lane(CODE_DIM) * jnp.dtype(encoder.dtype).itemsize
    dec_b = CODE_DIM * IN_DIM * jnp.dtype(decoder.dtype).itemsize
    vmem_needed = 2 * (x_tile_b + y_tile_b + xe_tile_b + enc_b + dec_b)
    # Headroom for compiler scratch; cap below v7x's 64 MiB physical VMEM.
    vmem_limit = int(min(max(vmem_needed + (8 << 20), 32 << 20), 56 << 20))

    # Advisory cost hint: bandwidth-heavy op (no padding traffic anymore).
    cost = pl.CostEstimate(
        flops=4 * M * IN_DIM * CODE_DIM,
        transcendentals=0,
        bytes_accessed=(
            M * IN_DIM * itemsize            # read x
            + M * IN_DIM * itemsize          # write y
            + M * CODE_DIM * itemsize        # write xe
            + 2 * IN_DIM * CODE_DIM * itemsize  # weights
        ),
    )

    # NOTE(v7x): with 2 TensorCores per chip, dimension_semantics of
    # (pltpu.CORE_PARALLEL,) can shard the row-tile grid across both cores;
    # kept at "parallel" here for portability across v5e/v6e/v7x.
    xe, y = pl.pallas_call(
        kernel,
        out_shape=(
            jax.ShapeDtypeStruct((M, CODE_DIM), out_dtype),  # x @ encoder
            jax.ShapeDtypeStruct((M, IN_DIM), out_dtype),    # (x @ E) @ D
        ),
        grid=grid,
        in_specs=[
            pl.BlockSpec((tm_eff, IN_DIM), lambda i: (i, 0)),      # x tile
            pl.BlockSpec((IN_DIM, CODE_DIM), lambda i: (0, 0)),    # encoder (resident)
            pl.BlockSpec((CODE_DIM, IN_DIM), lambda i: (0, 0)),    # decoder (resident)
        ],
        out_specs=(
            pl.BlockSpec((tm_eff, CODE_DIM), lambda i: (i, 0)),
            pl.BlockSpec((tm_eff, IN_DIM), lambda i: (i, 0)),
        ),
        compiler_params=pltpu.CompilerParams(
            dimension_semantics=("parallel",),
            vmem_limit_bytes=vmem_limit,
        ),
        cost_estimate=cost,
    )(x, encoder, decoder)

    return xe, y


if __name__ == "__main__":
    key = jax.random.PRNGKey(0)
    kx, ke, kd = jax.random.split(key, 3)

    # Deterministic "randn"-style parameters matching nn.Parameter shapes.
    encoder = jax.random.normal(ke, (IN_DIM, CODE_DIM), dtype=jnp.float32)
    decoder = jax.random.normal(kd, (CODE_DIM, IN_DIM), dtype=jnp.float32)

    # Small input; M deliberately not a power of two.
    M = 200
    x = jax.random.normal(kx, (M, IN_DIM), dtype=jnp.float32)

    # 1) Default tile -> single grid step (tm auto-shrinks to 200).
    xe, y = encoder_decoder(x, encoder, decoder)
    jax.block_until_ready((xe, y))

    # 2) Tiny tile -> multi-step grid with a ragged (masked) last block.
    xe2, y2 = encoder_decoder(x, encoder, decoder, tm=64)
    jax.block_until_ready((xe2, y2))

    # Reference check in plain f32 JAX.  Kernel uses bf16 MXU multiplicands
    # with f32 accumulation, so tolerances reflect bf16 rounding (~0.4% rel).
    ref_xe = x @ encoder
    ref_y = ref_xe @ decoder
    for a in (xe, xe2):
        assert a.shape == ref_xe.shape
        assert jnp.allclose(a, ref_xe, atol=1.0, rtol=2e-2)
    for a in (y, y2):
        assert a.shape == ref_y.shape
        assert jnp.allclose(a, ref_y, atol=3.0, rtol=3e-2)

    # TODO(synk): optional lane-dense xe slab ((M//8,128) writeback + free
    # wrapper reshape) would remove masked vst.msk stores; skipped since xe is
    # only ~3% of HBM bytes.
    print("KERNEL_OK")
</pallas_src>

<mosaic_0001>
module attributes {stable_mosaic.version = 11 : i64} {
  func.func @kernel(%arg0: i32, %arg1: memref<200x512xf32, #tpu.memory_space<vmem>>, %arg2: memref<512x16xf32, #tpu.memory_space<vmem>>, %arg3: memref<16x512xf32, #tpu.memory_space<vmem>>, %arg4: memref<200x16xf32, #tpu.memory_space<vmem>>, %arg5: memref<200x512xf32, #tpu.memory_space<vmem>>) attributes {dimension_semantics = [#tpu.dimension_semantics<parallel>], iteration_bounds = array<i64: 1>, scalar_prefetch = 0 : i64, scratch_operands = 0 : i64, tpu.core_type = #tpu.core_type<tc>, window_params = [{transform_indices = @transform_0, window_bounds = array<i64: 200, 512>}, {pipeline_mode = #tpu.pipeline_mode<synchronous>, transform_indices = @transform_1, window_bounds = array<i64: 512, 16>}, {pipeline_mode = #tpu.pipeline_mode<synchronous>, transform_indices = @transform_2, window_bounds = array<i64: 16, 512>}, {transform_indices = @transform_3, window_bounds = array<i64: 200, 16>}, {transform_indices = @transform_4, window_bounds = array<i64: 200, 512>}]} {
    %c0 = arith.constant 0 : index
    %c0_0 = arith.constant 0 : index
    %0 = vector.load %arg1[%c0, %c0_0] : memref<200x512xf32, #tpu.memory_space<vmem>>, vector<200x512xf32>
    %c0_1 = arith.constant 0 : index
    %c0_2 = arith.constant 0 : index
    %1 = vector.load %arg2[%c0_1, %c0_2] : memref<512x16xf32, #tpu.memory_space<vmem>>, vector<512x16xf32>
    %c0_3 = arith.constant 0 : index
    %c0_4 = arith.constant 0 : index
    %2 = vector.load %arg3[%c0_3, %c0_4] : memref<16x512xf32, #tpu.memory_space<vmem>>, vector<16x512xf32>
    %3 = arith.truncf %0 : vector<200x512xf32> to vector<200x512xbf16>
    %4 = arith.truncf %1 : vector<512x16xf32> to vector<512x16xbf16>
    %cst = arith.constant dense<0.000000e+00> : vector<200x16xf32>
    %5 = tpu.matmul %3, %4, %cst {dimension_numbers = #tpu.dot_dimension_numbers<[1], [0], [0], [1], [0, 0, 1, 1], [], []>} : vector<200x512xbf16>, vector<512x16xbf16>, vector<200x16xf32> -> vector<200x16xf32>
    %c0_5 = arith.constant 0 : index
    %c0_6 = arith.constant 0 : index
    %6 = vector.load %arg4[%c0_5, %c0_6] : memref<200x16xf32, #tpu.memory_space<vmem>>, vector<200x16xf32>
    tpu.vector_store %arg4[%c0_5, %c0_6], %5 {strides = array<i32>} : memref<200x16xf32, #tpu.memory_space<vmem>>, vector<200x16xf32>,
    %7 = arith.truncf %5 : vector<200x16xf32> to vector<200x16xbf16>
    %8 = arith.truncf %2 : vector<16x512xf32> to vector<16x512xbf16>
    %cst_7 = arith.constant dense<0.000000e+00> : vector<200x512xf32>
    %9 = tpu.matmul %7, %8, %cst_7 {dimension_numbers = #tpu.dot_dimension_numbers<[1], [0], [0], [1], [0, 0, 1, 1], [], []>} : vector<200x16xbf16>, vector<16x512xbf16>, vector<200x512xf32> -> vector<200x512xf32>
    %c0_8 = arith.constant 0 : index
    %c0_9 = arith.constant 0 : index
    %10 = vector.load %arg5[%c0_8, %c0_9] : memref<200x512xf32, #tpu.memory_space<vmem>>, vector<200x512xf32>
    tpu.vector_store %arg5[%c0_8, %c0_9], %9 {strides = array<i32>} : memref<200x512xf32, #tpu.memory_space<vmem>>, vector<200x512xf32>,
    return
  }
  func.func @transform_0(%arg0: i32) -> (i32, i32) {
    %c0_i32 = arith.constant 0 : i32
    %c0_i32_0 = arith.constant 0 : i32
    return %arg0, %c0_i32 : i32, i32
  }
  func.func @transform_1(%arg0: i32) -> (i32, i32) {
    %c0_i32 = arith.constant 0 : i32
    %c0_i32_0 = arith.constant 0 : i32
    %c0_i32_1 = arith.constant 0 : i32
    return %c0_i32, %c0_i32_0 : i32, i32
  }
  func.func @transform_2(%arg0: i32) -> (i32, i32) {
    %c0_i32 = arith.constant 0 : i32
    %c0_i32_0 = arith.constant 0 : i32
    %c0_i32_1 = arith.constant 0 : i32
    return %c0_i32, %c0_i32_0 : i32, i32
  }
  func.func @transform_3(%arg0: i32) -> (i32, i32) {
    %c0_i32 = arith.constant 0 : i32
    %c0_i32_0 = arith.constant 0 : i32
    return %arg0, %c0_i32 : i32, i32
  }
  func.func @transform_4(%arg0: i32) -> (i32, i32) {
    %c0_i32 = arith.constant 0 : i32
    %c0_i32_0 = arith.constant 0 : i32
    return %arg0, %c0_i32 : i32, i32
  }
}

</mosaic_0001>

<llo_original>
// kernel: tpu_custom_call.1
$region0: #{tpu_custom_call.1}
  #allocation0 [shape = 'u32[]', space=smem, size = 0x4, offset = 0x4, fixed_abs, tag = 'smem constant byte address 0x4 - core index']
  #allocation1 [shape = 'u32[144,128]{1,0:T(1,128)}', space=vmem, size = 0x12000, scoped, tag = 'internal scratch']
  %s0 = inlined_call_operand.hbm [shape: f32[200,512], index: 0, kind: input, shape index: {}]
  %s1 = inlined_call_operand.vmem [shape: f32[512,16], index: 1, kind: input, shape index: {}]
  %s2 = inlined_call_operand.vmem [shape: f32[16,512], index: 2, kind: input, shape index: {}]
  %s3 = inlined_call_operand.vmem [shape: f32[200,16], index: 3, kind: output, shape index: {0}]
  %s4 = inlined_call_operand.hbm [shape: f32[200,512], index: 4, kind: output, shape index: {1}]
  %5 = xla_tuple %s3, %s4
  %s6 = sld [smem:[#allocation0]]
  $region34: #{tpu_custom_call.1} parent=0
    _
  %s8 = ssub.s32 1, %s6
  %s9 = scalar_select 0, %s8, %s6
  $region1: #{tpu_custom_call.1} parent=0
    #allocation2 [shape = 'u8[409600]{0}', space=vmem, size = 0x64000, scoped, tag = 'input window, operand 0, single buffered']
    #allocation3 [shape = 's32[1]{0}', space=sflag, size = 0x4, scoped, tag = 'scoped memory for tpu_custom_call.1']
    #allocation4 [shape = 's32[1]{0}', space=sflag, size = 0x4, scoped, tag = 'scoped memory for tpu_custom_call.1']
    #allocation5 [shape = 'u8[409600]{0}', space=vmem, size = 0x64000, scoped, tag = 'output window, operand 1, single buffered']
    %10 = vsyncpa [#allocation3], 0
    %11 = vsyncpa [#allocation4], 0
    // Predicated region
    $region2: #{tpu_custom_call.1} parent=1 // pred_check
      _
    $region3: #{tpu_custom_call.1} parent=1 // pred_check_branch
      %13 = sbr.rel (0) target = $region5
    $region4: #{tpu_custom_call.1} parent=1 // pred_region
      %s15 = ssub.s32 12800, 12800
      %16 = vsyncadd [#allocation3], %s15
      %s17 = sshll.u32 [#allocation2], 4
      %s18 = int_to_ptr.vmem [resolvable:$true] %s17
      %23 = dma.hbm_to_vmem [thread:$0]  %s0, 12800, %s18, [#allocation3], 512, 512, 32
    $region5: #{tpu_custom_call.1} parent=1 // pred_fallthru
      _
    // Predicated region
    $region6: #{tpu_custom_call.1} parent=1 // pred_check
      _
    $region7: #{tpu_custom_call.1} parent=1 // pred_check_branch
      %25 = sbr.rel (0) target = $region9
    $region8: #{tpu_custom_call.1} parent=1 // pred_region
      _
    $region9: #{tpu_custom_call.1} parent=1 // pred_fallthru
      _
    // Predicated region
    $region10: #{tpu_custom_call.1} parent=1 // pred_check
      _
    $region11: #{tpu_custom_call.1} parent=1 // pred_check_branch
      %27 = sbr.rel (0) target = $region13
    $region12: #{tpu_custom_call.1} parent=1 // pred_region
      _
    $region13: #{tpu_custom_call.1} parent=1 // pred_fallthru
      _
    // Predicated region
    $region14: #{tpu_custom_call.1} parent=1 // pred_check
      _
    $region15: #{tpu_custom_call.1} parent=1 // pred_check_branch
      %29 = sbr.rel (0) target = $region17
    $region16: #{tpu_custom_call.1} parent=1 // pred_region
      %30 = dma.done [#allocation3], 12800
    $region17: #{tpu_custom_call.1} parent=1 // pred_fallthru
      _
    %v32 = vld [vmem:[#allocation2] sm:$0xff]
    %v33 = vld [vmem:[#allocation2 + $0x8] sm:$0xff]
    %v34 = vld [vmem:[#allocation2 + $0x10] sm:$0xff]
    %v35 = vld [vmem:[#allocation2 + $0x18] sm:$0xff]
    %v36 = vld [vmem:[#allocation2 + $0x20] sm:$0xff]
    %v37 = vld [vmem:[#allocation2 + $0x28] sm:$0xff]
    %v38 = vld [vmem:[#allocation2 + $0x30] sm:$0xff]
    %v39 = vld [vmem:[#allocation2 + $0x38] sm:$0xff]
    %v40 = vld [vmem:[#allocation2 + $0x40] sm:$0xff]
    %v41 = vld [vmem:[#allocation2 + $0x48] sm:$0xff]
    %v42 = vld [vmem:[#allocation2 + $0x50] sm:$0xff]
    %v43 = vld [vmem:[#allocation2 + $0x58] sm:$0xff]
    %v44 = vld [vmem:[#allocation2 + $0x60] sm:$0xff]
    %v45 = vld [vmem:[#allocation2 + $0x68] sm:$0xff]
    %v46 = vld [vmem:[#allocation2 + $0x70] sm:$0xff]
    %v47 = vld [vmem:[#allocation2 + $0x78] sm:$0xff]
    %v48 = vld [vmem:[#allocation2 + $0x80] sm:$0xff]
    %v49 = vld [vmem:[#allocation2 + $0x88] sm:$0xff]
    %v50 = vld [vmem:[#allocation2 + $0x90] sm:$0xff]
    %v51 = vld [vmem:[#allocation2 + $0x98] sm:$0xff]
    %v52 = vld [vmem:[#allocation2 + $0xa0] sm:$0xff]
    %v53 = vld [vmem:[#allocation2 + $0xa8] sm:$0xff]
    %v54 = vld [vmem:[#allocation2 + $0xb0] sm:$0xff]
    %v55 = vld [vmem:[#allocation2 + $0xb8] sm:$0xff]
    %v56 = vld [vmem:[#allocation2 + $0xc0] sm:$0xff]
    %v57 = vld [vmem:[#allocation2 + $0xc8] sm:$0xff]
    %v58 = vld [vmem:[#allocation2 + $0xd0] sm:$0xff]
    %v59 = vld [vmem:[#allocation2 + $0xd8] sm:$0xff]
    %v60 = vld [vmem:[#allocation2 + $0xe0] sm:$0xff]
    %v61 = vld [vmem:[#allocation2 + $0xe8] sm:$0xff]
    %v62 = vld [vmem:[#allocation2 + $0xf0] sm:$0xff]
    %v63 = vld [vmem:[#allocation2 + $0xf8] sm:$0xff]
    %v64 = vld [vmem:[#allocation2 + $0x100] sm:$0xff]
    %v65 = vld [vmem:[#allocation2 + $0x108] sm:$0xff]
    %v66 = vld [vmem:[#allocation2 + $0x110] sm:$0xff]
    %v67 = vld [vmem:[#allocation2 + $0x118] sm:$0xff]
    %v68 = vld [vmem:[#allocation2 + $0x120] sm:$0xff]
    %v69 = vld [vmem:[#allocation2 + $0x128] sm:$0xff]
    %v70 = vld [vmem:[#allocation2 + $0x130] sm:$0xff]
    %v71 = vld [vmem:[#allocation2 + $0x138] sm:$0xff]
    %v72 = vld [vmem:[#allocation2 + $0x140] sm:$0xff]
    %v73 = vld [vmem:[#allocation2 + $0x148] sm:$0xff]
    %v74 = vld [vmem:[#allocation2 + $0x150] sm:$0xff]
    %v75 = vld [vmem:[#allocation2 + $0x158] sm:$0xff]
    %v76 = vld [vmem:[#allocation2 + $0x160] sm:$0xff]
    %v77 = vld [vmem:[#allocation2 + $0x168] sm:$0xff]
    %v78 = vld [vmem:[#allocation2 + $0x170] sm:$0xff]
    %v79 = vld [vmem:[#allocation2 + $0x178] sm:$0xff]
    %v80 = vld [vmem:[#allocation2 + $0x180] sm:$0xff]
    %v81 = vld [vmem:[#allocation2 + $0x188] sm:$0xff]
    %v82 = vld [vmem:[#allocation2 + $0x190] sm:$0xff]
    %v83 = vld [vmem:[#allocation2 + $0x198] sm:$0xff]
    %v84 = vld [vmem:[#allocation2 + $0x1a0] sm:$0xff]
    %v85 = vld [vmem:[#allocation2 + $0x1a8] sm:$0xff]
    %v86 = vld [vmem:[#allocation2 + $0x1b0] sm:$0xff]
    %v87 = vld [vmem:[#allocation2 + $0x1b8] sm:$0xff]
    %v88 = vld [vmem:[#allocation2 + $0x1c0] sm:$0xff]
    %v89 = vld [vmem:[#allocation2 + $0x1c8] sm:$0xff]
    %v90 = vld [vmem:[#allocation2 + $0x1d0] sm:$0xff]
    %v91 = vld [vmem:[#allocation2 + $0x1d8] sm:$0xff]
    %v92 = vld [vmem:[#allocation2 + $0x1e0] sm:$0xff]
    %v93 = vld [vmem:[#allocation2 + $0x1e8] sm:$0xff]
    %v94 = vld [vmem:[#allocation2 + $0x1f0] sm:$0xff]
    %v95 = vld [vmem:[#allocation2 + $0x1f8] sm:$0xff]
    %v96 = vld [vmem:[#allocation2 + $0x200] sm:$0xff]
    %v97 = vld [vmem:[#allocation2 + $0x208] sm:$0xff]
    %v98 = vld [vmem:[#allocation2 + $0x210] sm:$0xff]
    %v99 = vld [vmem:[#allocation2 + $0x218] sm:$0xff]
    %v100 = vld [vmem:[#allocation2 + $0x220] sm:$0xff]
    %v101 = vld [vmem:[#allocation2 + $0x228] sm:$0xff]
    %v102 = vld [vmem:[#allocation2 + $0x230] sm:$0xff]
    %v103 = vld [vmem:[#allocation2 + $0x238] sm:$0xff]
    %v104 = vld [vmem:[#allocation2 + $0x240] sm:$0xff]
    %v105 = vld [vmem:[#allocation2 + $0x248] sm:$0xff]
    %v106 = vld [vmem:[#allocation2 + $0x250] sm:$0xff]
    %v107 = vld [vmem:[#allocation2 + $0x258] sm:$0xff]
    %v108 = vld [vmem:[#allocation2 + $0x260] sm:$0xff]
    %v109 = vld [vmem:[#allocation2 + $0x268] sm:$0xff]
    %v110 = vld [vmem:[#allocation2 + $0x270] sm:$0xff]
    %v111 = vld [vmem:[#allocation2 + $0x278] sm:$0xff]
    %v112 = vld [vmem:[#allocation2 + $0x280] sm:$0xff]
    %v113 = vld [vmem:[#allocation2 + $0x288] sm:$0xff]
    %v114 = vld [vmem:[#allocation2 + $0x290] sm:$0xff]
    %v115 = vld [vmem:[#allocation2 + $0x298] sm:$0xff]
    %v116 = vld [vmem:[#allocation2 + $0x2a0] sm:$0xff]
    %v117 = vld [vmem:[#allocation2 + $0x2a8] sm:$0xff]
    %v118 = vld [vmem:[#allocation2 + $0x2b0] sm:$0xff]
    %v119 = vld [vmem:[#allocation2 + $0x2b8] sm:$0xff]
    %v120 = vld [vmem:[#allocation2 + $0x2c0] sm:$0xff]
    %v121 = vld [vmem:[#allocation2 + $0x2c8] sm:$0xff]
    %v122 = vld [vmem:[#allocation2 + $0x2d0] sm:$0xff]
    %v123 = vld [vmem:[#allocation2 + $0x2d8] sm:$0xff]
    %v124 = vld [vmem:[#allocation2 + $0x2e0] sm:$0xff]
    %v125 = vld [vmem:[#allocation2 + $0x2e8] sm:$0xff]
    %v126 = vld [vmem:[#allocation2 + $0x2f0] sm:$0xff]
    %v127 = vld [vmem:[#allocation2 + $0x2f8] sm:$0xff]
    %v128 = vld [vmem:[#allocation2 + $0x300] sm:$0xff]
    %v129 = vld [vmem:[#allocation2 + $0x308] sm:$0xff]
    %v130 = vld [vmem:[#allocation2 + $0x310] sm:$0xff]
    %v131 = vld [vmem:[#allocation2 + $0x318] sm:$0xff]
    %v132 = vld [vmem:[%s1] sm:$0xff]
    %v133 = vld [vmem:[%s1 + $0x8] sm:$0xff]
    %v134 = vld [vmem:[%s1 + $0x10] sm:$0xff]
    %v135 = vld [vmem:[%s1 + $0x18] sm:$0xff]
    %v136 = vld [vmem:[%s1 + $0x20] sm:$0xff]
    %v137 = vld [vmem:[%s1 + $0x28] sm:$0xff]
    %v138 = vld [vmem:[%s1 + $0x30] sm:$0xff]
    %v139 = vld [vmem:[%s1 + $0x38] sm:$0xff]
    %v140 = vld [vmem:[%s1 + $0x40] sm:$0xff]
    %v141 = vld [vmem:[%s1 + $0x48] sm:$0xff]
    %v142 = vld [vmem:[%s1 + $0x50] sm:$0xff]
    %v143 = vld [vmem:[%s1 + $0x58] sm:$0xff]
    %v144 = vld [vmem:[%s1 + $0x60] sm:$0xff]
    %v145 = vld [vmem:[%s1 + $0x68] sm:$0xff]
    %v146 = vld [vmem:[%s1 + $0x70] sm:$0xff]
    %v147 = vld [vmem:[%s1 + $0x78] sm:$0xff]
    %v148 = vld [vmem:[%s1 + $0x80] sm:$0xff]
    %v149 = vld [vmem:[%s1 + $0x88] sm:$0xff]
    %v150 = vld [vmem:[%s1 + $0x90] sm:$0xff]
    %v151 = vld [vmem:[%s1 + $0x98] sm:$0xff]
    %v152 = vld [vmem:[%s1 + $0xa0] sm:$0xff]
    %v153 = vld [vmem:[%s1 + $0xa8] sm:$0xff]
    %v154 = vld [vmem:[%s1 + $0xb0] sm:$0xff]
    %v155 = vld [vmem:[%s1 + $0xb8] sm:$0xff]
    %v156 = vld [vmem:[%s1 + $0xc0] sm:$0xff]
    %v157 = vld [vmem:[%s1 + $0xc8] sm:$0xff]
    %v158 = vld [vmem:[%s1 + $0xd0] sm:$0xff]
    %v159 = vld [vmem:[%s1 + $0xd8] sm:$0xff]
    %v160 = vld [vmem:[%s1 + $0xe0] sm:$0xff]
    %v161 = vld [vmem:[%s1 + $0xe8] sm:$0xff]
    %v162 = vld [vmem:[%s1 + $0xf0] sm:$0xff]
    %v163 = vld [vmem:[%s1 + $0xf8] sm:$0xff]
    %v164 = vld [vmem:[%s1 + $0x100] sm:$0xff]
    %v165 = vld [vmem:[%s1 + $0x108] sm:$0xff]
    %v166 = vld [vmem:[%s1 + $0x110] sm:$0xff]
    %v167 = vld [vmem:[%s1 + $0x118] sm:$0xff]
    %v168 = vld [vmem:[%s1 + $0x120] sm:$0xff]
    %v169 = vld [vmem:[%s1 + $0x128] sm:$0xff]
    %v170 = vld [vmem:[%s1 + $0x130] sm:$0xff]
    %v171 = vld [vmem:[%s1 + $0x138] sm:$0xff]
    %v172 = vld [vmem:[%s1 + $0x140] sm:$0xff]
    %v173 = vld [vmem:[%s1 + $0x148] sm:$0xff]
    %v174 = vld [vmem:[%s1 + $0x150] sm:$0xff]
    %v175 = vld [vmem:[%s1 + $0x158] sm:$0xff]
    %v176 = vld [vmem:[%s1 + $0x160] sm:$0xff]
    %v177 = vld [vmem:[%s1 + $0x168] sm:$0xff]
    %v178 = vld [vmem:[%s1 + $0x170] sm:$0xff]
    %v179 = vld [vmem:[%s1 + $0x178] sm:$0xff]
    %v180 = vld [vmem:[%s1 + $0x180] sm:$0xff]
    %v181 = vld [vmem:[%s1 + $0x188] sm:$0xff]
    %v182 = vld [vmem:[%s1 + $0x190] sm:$0xff]
    %v183 = vld [vmem:[%s1 + $0x198] sm:$0xff]
    %v184 = vld [vmem:[%s1 + $0x1a0] sm:$0xff]
    %v185 = vld [vmem:[%s1 + $0x1a8] sm:$0xff]
    %v186 = vld [vmem:[%s1 + $0x1b0] sm:$0xff]
    %v187 = vld [vmem:[%s1 + $0x1b8] sm:$0xff]
    %v188 = vld [vmem:[%s1 + $0x1c0] sm:$0xff]
    %v189 = vld [vmem:[%s1 + $0x1c8] sm:$0xff]
    %v190 = vld [vmem:[%s1 + $0x1d0] sm:$0xff]
    %v191 = vld [vmem:[%s1 + $0x1d8] sm:$0xff]
    %v192 = vld [vmem:[%s1 + $0x1e0] sm:$0xff]
    %v193 = vld [vmem:[%s1 + $0x1e8] sm:$0xff]
    %v194 = vld [vmem:[%s1 + $0x1f0] sm:$0xff]
    %v195 = vld [vmem:[%s1 + $0x1f8] sm:$0xff]
    %v196 = vld [vmem:[%s2] sm:$0xff]
    %v197 = vld [vmem:[%s2 + $0x8] sm:$0xff]
    %v198 = vld [vmem:[%s2 + $0x10] sm:$0xff]
    %v199 = vld [vmem:[%s2 + $0x18] sm:$0xff]
    %v200 = vld [vmem:[%s2 + $0x20] sm:$0xff]
    %v201 = vld [vmem:[%s2 + $0x28] sm:$0xff]
    %v202 = vld [vmem:[%s2 + $0x30] sm:$0xff]
    %v203 = vld [vmem:[%s2 + $0x38] sm:$0xff]
    %v204 = vpack.c.bf16 %v36, %v32
    %v205 = vpack.c.bf16 %v37, %v33
    %v206 = vpack.c.bf16 %v38, %v34
    %v207 = vpack.c.bf16 %v39, %v35
    %v208 = vpack.c.bf16 %v44, %v40
    %v209 = vpack.c.bf16 %v45, %v41
    %v210 = vpack.c.bf16 %v46, %v42
    %v211 = vpack.c.bf16 %v47, %v43
    %v212 = vpack.c.bf16 %v52, %v48
    %v213 = vpack.c.bf16 %v53, %v49
    %v214 = vpack.c.bf16 %v54, %v50
    %v215 = vpack.c.bf16 %v55, %v51
    %v216 = vpack.c.bf16 %v60, %v56
    %v217 = vpack.c.bf16 %v61, %v57
    %v218 = vpack.c.bf16 %v62, %v58
    %v219 = vpack.c.bf16 %v63, %v59
    %v220 = vpack.c.bf16 %v68, %v64
    %v221 = vpack.c.bf16 %v69, %v65
    %v222 = vpack.c.bf16 %v70, %v66
    %v223 = vpack.c.bf16 %v71, %v67
    %v224 = vpack.c.bf16 %v76, %v72
    %v225 = vpack.c.bf16 %v77, %v73
    %v226 = vpack.c.bf16 %v78, %v74
    %v227 = vpack.c.bf16 %v79, %v75
    %v228 = vpack.c.bf16 %v84, %v80
    %v229 = vpack.c.bf16 %v85, %v81
    %v230 = vpack.c.bf16 %v86, %v82
    %v231 = vpack.c.bf16 %v87, %v83
    %v232 = vpack.c.bf16 %v92, %v88
    %v233 = vpack.c.bf16 %v93, %v89
    %v234 = vpack.c.bf16 %v94, %v90
    %v235 = vpack.c.bf16 %v95, %v91
    %v236 = vpack.c.bf16 %v100, %v96
    %v237 = vpack.c.bf16 %v101, %v97
    %v238 = vpack.c.bf16 %v102, %v98
    %v239 = vpack.c.bf16 %v103, %v99
    %v240 = vpack.c.bf16 %v108, %v104
    %v241 = vpack.c.bf16 %v109, %v105
    %v242 = vpack.c.bf16 %v110, %v106
    %v243 = vpack.c.bf16 %v111, %v107
    %v244 = vpack.c.bf16 %v116, %v112
    %v245 = vpack.c.bf16 %v117, %v113
    %v246 = vpack.c.bf16 %v118, %v114
    %v247 = vpack.c.bf16 %v119, %v115
    %v248 = vpack.c.bf16 %v124, %v120
    %v249 = vpack.c.bf16 %v125, %v121
    %v250 = vpack.c.bf16 %v126, %v122
    %v251 = vpack.c.bf16 %v127, %v123
    %v252 = vpack.c.bf16 %v128, %v128
    %v253 = vpack.c.bf16 %v129, %v129
    %v254 = vpack.c.bf16 %v130, %v130
    %v255 = vpack.c.bf16 %v131, %v131
    %v256 = vpack.c.bf16 %v133, %v132
    %v257 = vpack.c.bf16 %v135, %v134
    %v258 = vpack.c.bf16 %v137, %v136
    %v259 = vpack.c.bf16 %v139, %v138
    %v260 = vpack.c.bf16 %v141, %v140
    %v261 = vpack.c.bf16 %v143, %v142
    %v262 = vpack.c.bf16 %v145, %v144
    %v263 = vpack.c.bf16 %v147, %v146
    %v264 = vpack.c.bf16 %v149, %v148
    %v265 = vpack.c.bf16 %v151, %v150
    %v266 = vpack.c.bf16 %v153, %v152
    %v267 = vpack.c.bf16 %v155, %v154
    %v268 = vpack.c.bf16 %v157, %v156
    %v269 = vpack.c.bf16 %v159, %v158
    %v270 = vpack.c.bf16 %v161, %v160
    %v271 = vpack.c.bf16 %v163, %v162
    %v272 = vpack.c.bf16 %v165, %v164
    %v273 = vpack.c.bf16 %v167, %v166
    %v274 = vpack.c.bf16 %v169, %v168
    %v275 = vpack.c.bf16 %v171, %v170
    %v276 = vpack.c.bf16 %v173, %v172
    %v277 = vpack.c.bf16 %v175, %v174
    %v278 = vpack.c.bf16 %v177, %v176
    %v279 = vpack.c.bf16 %v179, %v178
    %v280 = vpack.c.bf16 %v181, %v180
    %v281 = vpack.c.bf16 %v183, %v182
    %v282 = vpack.c.bf16 %v185, %v184
    %v283 = vpack.c.bf16 %v187, %v186
    %v284 = vpack.c.bf16 %v189, %v188
    %v285 = vpack.c.bf16 %v191, %v190
    %v286 = vpack.c.bf16 %v193, %v192
    %v287 = vpack.c.bf16 %v195, %v194
    %288 = vmatprep.subr.bf16.mxu0 0
    %289 = vmatpush1.bf16.msra.mxu0 %v263
    %290 = vmatprep.subr.bf16.mxu0 0
    %291 = vmatpush1.bf16.msra.mxu0 %v262
    %292 = vmatprep.subr.bf16.mxu0 0
    %293 = vmatpush1.bf16.msra.mxu0 %v261
    %294 = vmatprep.subr.bf16.mxu0 0
    %295 = vmatpush1.bf16.msra.mxu0 %v260
    %296 = vmatprep.subr.bf16.mxu0 0
    %297 = vmatpush1.bf16.msra.mxu0 %v259
    %298 = vmatprep.subr.bf16.mxu0 0
    %299 = vmatpush1.bf16.msra.mxu0 %v258
    %300 = vmatprep.subr.bf16.mxu0 0
    %301 = vmatpush1.bf16.msra.mxu0 %v257
    %302 = vmatprep.subr.bf16.mxu0 0
    %303 = vmatpush1.bf16.msra.mxu0 %v256
    %304 = vmatprep.subr.bf16.mxu0 0
    %305 = vmatpush2.bf16.msra.mxu0 %v271
    %306 = vmatprep.subr.bf16.mxu0 0
    %307 = vmatpush2.bf16.msra.mxu0 %v270
    %308 = vmatprep.subr.bf16.mxu0 0
    %309 = vmatpush2.bf16.msra.mxu0 %v269
    %310 = vmatprep.subr.bf16.mxu0 0
    %311 = vmatpush2.bf16.msra.mxu0 %v268
    %312 = vmatprep.subr.bf16.mxu0 0
    %313 = vmatpush2.bf16.msra.mxu0 %v267
    %314 = vmatprep.subr.bf16.mxu0 0
    %315 = vmatpush2.bf16.msra.mxu0 %v266
    %316 = vmatprep.subr.bf16.mxu0 0
    %317 = vmatpush2.bf16.msra.mxu0 %v265
    %318 = vmatprep.subr.bf16.mxu0 0
    %319 = vmatpush2.bf16.msra.mxu0 %v264
    %320 = vmatprep.mubr.bf16.mxu0 %v205
    %321 = vmatmul.mubr.bf16.gmra.mxu0 %v204
    %v322 = vpop.f32.mrf.mxu0
    %v323 = vadd.f32 0.0, %v322
    %v324 = vpop.f32.mrf.mxu0
    %v325 = vpop.f32.mrf.mxu0
    %v326 = vadd.f32 0.0, %v325
    %v327 = vpop.f32.mrf.mxu0
    %328 = vmatprep.mubr.bf16.mxu0 %v209
    %329 = vmatmul.mubr.bf16.gmra.mxu0 %v208
    %v330 = vpop.f32.mrf.mxu0
    %v331 = vadd.f32 0.0, %v330
    %v332 = vpop.f32.mrf.mxu0
    %v333 = vpop.f32.mrf.mxu0
    %v334 = vadd.f32 0.0, %v333
    %v335 = vpop.f32.mrf.mxu0
    %336 = vmatprep.mubr.bf16.mxu0 %v213
    %337 = vmatmul.mubr.bf16.gmra.mxu0 %v212
    %v338 = vpop.f32.mrf.mxu0
    %v339 = vadd.f32 0.0, %v338
    %v340 = vpop.f32.mrf.mxu0
    %v341 = vpop.f32.mrf.mxu0
    %v342 = vadd.f32 0.0, %v341
    %v343 = vpop.f32.mrf.mxu0
    %344 = vmatprep.mubr.bf16.mxu0 %v217
    %345 = vmatmul.mubr.bf16.gmra.mxu0 %v216
    %v346 = vpop.f32.mrf.mxu0
    %v347 = vadd.f32 0.0, %v346
    %v348 = vpop.f32.mrf.mxu0
    %v349 = vpop.f32.mrf.mxu0
    %v350 = vadd.f32 0.0, %v349
    %v351 = vpop.f32.mrf.mxu0
    %352 = vmatprep.mubr.bf16.mxu0 %v221
    %353 = vmatmul.mubr.bf16.gmra.mxu0 %v220
    %v354 = vpop.f32.mrf.mxu0
    %v355 = vadd.f32 0.0, %v354
    %v356 = vpop.f32.mrf.mxu0
    %v357 = vpop.f32.mrf.mxu0
    %v358 = vadd.f32 0.0, %v357
    %v359 = vpop.f32.mrf.mxu0
    %360 = vmatprep.mubr.bf16.mxu0 %v225
    %361 = vmatmul.mubr.bf16.gmra.mxu0 %v224
    %v362 = vpop.f32.mrf.mxu0
    %v363 = vadd.f32 0.0, %v362
    %v364 = vpop.f32.mrf.mxu0
    %v365 = vpop.f32.mrf.mxu0
    %v366 = vadd.f32 0.0, %v365
    %v367 = vpop.f32.mrf.mxu0
    %368 = vmatprep.mubr.bf16.mxu0 %v229
    %369 = vmatmul.mubr.bf16.gmra.mxu0 %v228
    %v370 = vpop.f32.mrf.mxu0
    %v371 = vadd.f32 0.0, %v370
    %v372 = vpop.f32.mrf.mxu0
    %v373 = vpop.f32.mrf.mxu0
    %v374 = vadd.f32 0.0, %v373
    %v375 = vpop.f32.mrf.mxu0
    %376 = vmatprep.mubr.bf16.mxu0 %v233
    %377 = vmatmul.mubr.bf16.gmra.mxu0 %v232
    %v378 = vpop.f32.mrf.mxu0
    %v379 = vadd.f32 0.0, %v378
    %v380 = vpop.f32.mrf.mxu0
    %v381 = vpop.f32.mrf.mxu0
    %v382 = vadd.f32 0.0, %v381
    %v383 = vpop.f32.mrf.mxu0
    %384 = vmatprep.mubr.bf16.mxu0 %v237
    %385 = vmatmul.mubr.bf16.gmra.mxu0 %v236
    %v386 = vpop.f32.mrf.mxu0
    %v387 = vadd.f32 0.0, %v386
    %v388 = vpop.f32.mrf.mxu0
    %v389 = vpop.f32.mrf.mxu0
    %v390 = vadd.f32 0.0, %v389
    %v391 = vpop.f32.mrf.mxu0
    %392 = vmatprep.mubr.bf16.mxu0 %v241
    %393 = vmatmul.mubr.bf16.gmra.mxu0 %v240
    %v394 = vpop.f32.mrf.mxu0
    %v395 = vadd.f32 0.0, %v394
    %v396 = vpop.f32.mrf.mxu0
    %v397 = vpop.f32.mrf.mxu0
    %v398 = vadd.f32 0.0, %v397
    %v399 = vpop.f32.mrf.mxu0
    %400 = vmatprep.mubr.bf16.mxu0 %v245
    %401 = vmatmul.mubr.bf16.gmra.mxu0 %v244
    %v402 = vpop.f32.mrf.mxu0
    %v403 = vadd.f32 0.0, %v402
    %v404 = vpop.f32.mrf.mxu0
    %v405 = vpop.f32.mrf.mxu0
    %v406 = vadd.f32 0.0, %v405
    %v407 = vpop.f32.mrf.mxu0
    %408 = vmatprep.mubr.bf16.mxu0 %v249
    %409 = vmatmul.mubr.bf16.gmra.mxu0 %v248
    %v410 = vpop.f32.mrf.mxu0
    %v411 = vadd.f32 0.0, %v410
    %v412 = vpop.f32.mrf.mxu0
    %v413 = vpop.f32.mrf.mxu0
    %v414 = vadd.f32 0.0, %v413
    %v415 = vpop.f32.mrf.mxu0
    %416 = vmatprep.mubr.bf16.mxu0 %v253
    %417 = vmatmul.mubr.bf16.gmra.mxu0 %v252
    %v418 = vpop.f32.mrf.mxu0
    %v419 = vadd.f32 0.0, %v418
    %v420 = vpop.f32.mrf.mxu0
    %v421 = vpop.f32.mrf.mxu0
    %v422 = vpop.f32.mrf.mxu0
    %423 = vdwg.mxu0
    %424 = vmatprep.subr.bf16.mxu0 0
    %425 = vmatpush1.bf16.msra.mxu0 %v279
    %426 = vmatprep.subr.bf16.mxu0 0
    %427 = vmatpush1.bf16.msra.mxu0 %v278
    %428 = vmatprep.subr.bf16.mxu0 0
    %429 = vmatpush1.bf16.msra.mxu0 %v277
    %430 = vmatprep.subr.bf16.mxu0 0
    %431 = vmatpush1.bf16.msra.mxu0 %v276
    %432 = vmatprep.subr.bf16.mxu0 0
    %433 = vmatpush1.bf16.msra.mxu0 %v275
    %434 = vmatprep.subr.bf16.mxu0 0
    %435 = vmatpush1.bf16.msra.mxu0 %v274
    %436 = vmatprep.subr.bf16.mxu0 0
    %437 = vmatpush1.bf16.msra.mxu0 %v273
    %438 = vmatprep.subr.bf16.mxu0 0
    %439 = vmatpush1.bf16.msra.mxu0 %v272
    %440 = vmatprep.subr.bf16.mxu0 0
    %441 = vmatpush2.bf16.msra.mxu0 %v287
    %442 = vmatprep.subr.bf16.mxu0 0
    %443 = vmatpush2.bf16.msra.mxu0 %v286
    %444 = vmatprep.subr.bf16.mxu0 0
    %445 = vmatpush2.bf16.msra.mxu0 %v285
    %446 = vmatprep.subr.bf16.mxu0 0
    %447 = vmatpush2.bf16.msra.mxu0 %v284
    %448 = vmatprep.subr.bf16.mxu0 0
    %449 = vmatpush2.bf16.msra.mxu0 %v283
    %450 = vmatprep.subr.bf16.mxu0 0
    %451 = vmatpush2.bf16.msra.mxu0 %v282
    %452 = vmatprep.subr.bf16.mxu0 0
    %453 = vmatpush2.bf16.msra.mxu0 %v281
    %454 = vmatprep.subr.bf16.mxu0 0
    %455 = vmatpush2.bf16.msra.mxu0 %v280
    %456 = vmatprep.mubr.bf16.mxu0 %v207
    %457 = vmatmul.mubr.bf16.gmra.mxu0 %v206
    %v458 = vpop.f32.mrf.mxu0
    %v459 = vadd.f32 %v323, %v458
    %v460 = vpop.f32.mrf.mxu0
    %v461 = vpop.f32.mrf.mxu0
    %v462 = vadd.f32 %v326, %v461
    %v463 = vpop.f32.mrf.mxu0
    %464 = vmatprep.mubr.bf16.mxu0 %v211
    %465 = vmatmul.mubr.bf16.gmra.mxu0 %v210
    %v466 = vpop.f32.mrf.mxu0
    %v467 = vadd.f32 %v331, %v466
    %v468 = vpop.f32.mrf.mxu0
    %v469 = vpop.f32.mrf.mxu0
    %v470 = vadd.f32 %v334, %v469
    %v471 = vpop.f32.mrf.mxu0
    %472 = vmatprep.mubr.bf16.mxu0 %v215
    %473 = vmatmul.mubr.bf16.gmra.mxu0 %v214
    %v474 = vpop.f32.mrf.mxu0
    %v475 = vadd.f32 %v339, %v474
    %v476 = vpop.f32.mrf.mxu0
    %v477 = vpop.f32.mrf.mxu0
    %v478 = vadd.f32 %v342, %v477
    %v479 = vpop.f32.mrf.mxu0
    %480 = vmatprep.mubr.bf16.mxu0 %v219
    %481 = vmatmul.mubr.bf16.gmra.mxu0 %v218
    %v482 = vpop.f32.mrf.mxu0
    %v483 = vadd.f32 %v347, %v482
    %v484 = vpop.f32.mrf.mxu0
    %v485 = vpop.f32.mrf.mxu0
    %v486 = vadd.f32 %v350, %v485
    %v487 = vpop.f32.mrf.mxu0
    %488 = vmatprep.mubr.bf16.mxu0 %v223
    %489 = vmatmul.mubr.bf16.gmra.mxu0 %v222
    %v490 = vpop.f32.mrf.mxu0
    %v491 = vadd.f32 %v355, %v490
    %v492 = vpop.f32.mrf.mxu0
    %v493 = vpop.f32.mrf.mxu0
    %v494 = vadd.f32 %v358, %v493
    %v495 = vpop.f32.mrf.mxu0
    %496 = vmatprep.mubr.bf16.mxu0 %v227
    %497 = vmatmul.mubr.bf16.gmra.mxu0 %v226
    %v498 = vpop.f32.mrf.mxu0
    %v499 = vadd.f32 %v363, %v498
    %v500 = vpop.f32.mrf.mxu0
    %v501 = vpop.f32.mrf.mxu0
    %v502 = vadd.f32 %v366, %v501
    %v503 = vpop.f32.mrf.mxu0
    %504 = vmatprep.mubr.bf16.mxu0 %v231
    %505 = vmatmul.mubr.bf16.gmra.mxu0 %v230
    %v506 = vpop.f32.mrf.mxu0
    %v507 = vadd.f32 %v371, %v506
    %v508 = vpop.f32.mrf.mxu0
    %v509 = vpop.f32.mrf.mxu0
    %v510 = vadd.f32 %v374, %v509
    %v511 = vpop.f32.mrf.mxu0
    %512 = vmatprep.mubr.bf16.mxu0 %v235
    %513 = vmatmul.mubr.bf16.gmra.mxu0 %v234
    %v514 = vpop.f32.mrf.mxu0
    %v515 = vadd.f32 %v379, %v514
    %v516 = vpop.f32.mrf.mxu0
    %v517 = vpop.f32.mrf.mxu0
    %v518 = vadd.f32 %v382, %v517
    %v519 = vpop.f32.mrf.mxu0
    %520 = vmatprep.mubr.bf16.mxu0 %v239
    %521 = vmatmul.mubr.bf16.gmra.mxu0 %v238
    %v522 = vpop.f32.mrf.mxu0
    %v523 = vadd.f32 %v387, %v522
    %v524 = vpop.f32.mrf.mxu0
    %v525 = vpop.f32.mrf.mxu0
    %v526 = vadd.f32 %v390, %v525
    %v527 = vpop.f32.mrf.mxu0
    %528 = vmatprep.mubr.bf16.mxu0 %v243
    %529 = vmatmul.mubr.bf16.gmra.mxu0 %v242
    %v530 = vpop.f32.mrf.mxu0
    %v531 = vadd.f32 %v395, %v530
    %v532 = vpop.f32.mrf.mxu0
    %v533 = vpop.f32.mrf.mxu0
    %v534 = vadd.f32 %v398, %v533
    %v535 = vpop.f32.mrf.mxu0
    %536 = vmatprep.mubr.bf16.mxu0 %v247
    %537 = vmatmul.mubr.bf16.gmra.mxu0 %v246
    %v538 = vpop.f32.mrf.mxu0
    %v539 = vadd.f32 %v403, %v538
    %v540 = vpop.f32.mrf.mxu0
    %v541 = vpop.f32.mrf.mxu0
    %v542 = vadd.f32 %v406, %v541
    %v543 = vpop.f32.mrf.mxu0
    %544 = vmatprep.mubr.bf16.mxu0 %v251
    %545 = vmatmul.mubr.bf16.gmra.mxu0 %v250
    %v546 = vpop.f32.mrf.mxu0
    %v547 = vadd.f32 %v411, %v546
    %v548 = vpop.f32.mrf.mxu0
    %v549 = vpop.f32.mrf.mxu0
    %v550 = vadd.f32 %v414, %v549
    %v551 = vpop.f32.mrf.mxu0
    %552 = vmatprep.mubr.bf16.mxu0 %v255
    %553 = vmatmul.mubr.bf16.gmra.mxu0 %v254
    %v554 = vpop.f32.mrf.mxu0
    %v555 = vadd.f32 %v419, %v554
    %v556 = vpop.f32.mrf.mxu0
    %v557 = vpop.f32.mrf.mxu0
    %v558 = vpop.f32.mrf.mxu0
    %559 = vdwg.mxu0
    %vm560 = vcmask 130048
    %561 = vst.msk [vmem:[%s3] sm:$0xff] %vm560, %v459
    %562 = vst.msk [vmem:[%s3 + $0x8] sm:$0xff] %vm560, %v462
    %563 = vst.msk [vmem:[%s3 + $0x10] sm:$0xff] %vm560, %v467
    %564 = vst.msk [vmem:[%s3 + $0x18] sm:$0xff] %vm560, %v470
    %565 = vst.msk [vmem:[%s3 + $0x20] sm:$0xff] %vm560, %v475
    %566 = vst.msk [vmem:[%s3 + $0x28] sm:$0xff] %vm560, %v478
    %567 = vst.msk [vmem:[%s3 + $0x30] sm:$0xff] %vm560, %v483
    %568 = vst.msk [vmem:[%s3 + $0x38] sm:$0xff] %vm560, %v486
    %569 = vst.msk [vmem:[%s3 + $0x40] sm:$0xff] %vm560, %v491
    %570 = vst.msk [vmem:[%s3 + $0x48] sm:$0xff] %vm560, %v494
    %571 = vst.msk [vmem:[%s3 + $0x50] sm:$0xff] %vm560, %v499
    %572 = vst.msk [vmem:[%s3 + $0x58] sm:$0xff] %vm560, %v502
    %573 = vst.msk [vmem:[%s3 + $0x60] sm:$0xff] %vm560, %v507
    %574 = vst.msk [vmem:[%s3 + $0x68] sm:$0xff] %vm560, %v510
    %575 = vst.msk [vmem:[%s3 + $0x70] sm:$0xff] %vm560, %v515
    %576 = vst.msk [vmem:[%s3 + $0x78] sm:$0xff] %vm560, %v518
    %577 = vst.msk [vmem:[%s3 + $0x80] sm:$0xff] %vm560, %v523
    %578 = vst.msk [vmem:[%s3 + $0x88] sm:$0xff] %vm560, %v526
    %579 = vst.msk [vmem:[%s3 + $0x90] sm:$0xff] %vm560, %v531
    %580 = vst.msk [vmem:[%s3 + $0x98] sm:$0xff] %vm560, %v534
    %581 = vst.msk [vmem:[%s3 + $0xa0] sm:$0xff] %vm560, %v539
    %582 = vst.msk [vmem:[%s3 + $0xa8] sm:$0xff] %vm560, %v542
    %583 = vst.msk [vmem:[%s3 + $0xb0] sm:$0xff] %vm560, %v547
    %584 = vst.msk [vmem:[%s3 + $0xb8] sm:$0xff] %vm560, %v550
    %585 = vst.msk [vmem:[%s3 + $0xc0] sm:$0xff] %vm560, %v555
    %v586 = vpack.c.bf16 %v462, %v459
    %v587 = vpack.c.bf16 %v470, %v467
    %v588 = vpack.c.bf16 %v478, %v475
    %v589 = vpack.c.bf16 %v486, %v483
    %v590 = vpack.c.bf16 %v494, %v491
    %v591 = vpack.c.bf16 %v502, %v499
    %v592 = vpack.c.bf16 %v510, %v507
    %v593 = vpack.c.bf16 %v518, %v515
    %v594 = vpack.c.bf16 %v526, %v523
    %v595 = vpack.c.bf16 %v534, %v531
    %v596 = vpack.c.bf16 %v542, %v539
    %v597 = vpack.c.bf16 %v550, %v547
    %v598 = vpack.c.bf16 %v555, %v555
    %v599 = vpack.c.bf16 %v200, %v196
    %v600 = vpack.c.bf16 %v201, %v197
    %v601 = vpack.c.bf16 %v202, %v198
    %v602 = vpack.c.bf16 %v203, %v199
    %v604 = vsel %vm560, %v586, 0
    %v607 = vsel %vm560, %v587, 0
    %v610 = vsel %vm560, %v588, 0
    %v613 = vsel %vm560, %v589, 0
    %v616 = vsel %vm560, %v590, 0
    %v619 = vsel %vm560, %v591, 0
    %v622 = vsel %vm560, %v592, 0
    %v625 = vsel %vm560, %v593, 0
    %v628 = vsel %vm560, %v594, 0
    %v631 = vsel %vm560, %v595, 0
    %v634 = vsel %vm560, %v596, 0
    %v637 = vsel %vm560, %v597, 0
    %v640 = vsel %vm560, %v598, 0
    %642 = vmatprep.subr.bf16.mxu0 0
    %643 = vmatpush1.bf16.msra.mxu0 0
    %644 = vmatprep.subr.bf16.mxu0 0
    %645 = vmatpush1.bf16.msra.mxu0 0
    %646 = vmatprep.subr.bf16.mxu0 0
    %647 = vmatpush1.bf16.msra.mxu0 0
    %648 = vmatprep.subr.bf16.mxu0 0
    %649 = vmatpush1.bf16.msra.mxu0 0
    %650 = vmatprep.subr.bf16.mxu0 0
    %651 = vmatpush1.bf16.msra.mxu0 0
    %652 = vmatprep.subr.bf16.mxu0 0
    %653 = vmatpush1.bf16.msra.mxu0 0
    %654 = vmatprep.subr.bf16.mxu0 0
    %655 = vmatpush1.bf16.msra.mxu0 0
    %656 = vmatprep.subr.bf16.mxu0 %v600
    %657 = vmatpush1.bf16.msra.mxu0 %v599
    %658 = vmatprep.subr.bf16.mxu0 0
    %659 = vmatpush2.bf16.msra.mxu0 0
    %660 = vmatprep.subr.bf16.mxu0 0
    %661 = vmatpush2.bf16.msra.mxu0 0
    %662 = vmatprep.subr.bf16.mxu0 0
    %663 = vmatpush2.bf16.msra.mxu0 0
    %664 = vmatprep.subr.bf16.mxu0 0
    %665 = vmatpush2.bf16.msra.mxu0 0
    %666 = vmatprep.subr.bf16.mxu0 0
    %667 = vmatpush2.bf16.msra.mxu0 0
    %668 = vmatprep.subr.bf16.mxu0 0
    %669 = vmatpush2.bf16.msra.mxu0 0
    %670 = vmatprep.subr.bf16.mxu0 0
    %671 = vmatpush2.bf16.msra.mxu0 0
    %672 = vmatprep.subr.bf16.mxu0 0
    %673 = vmatpush2.bf16.msra.mxu0 0
    %674 = vmatprep.mubr.bf16.mxu0 0
    %675 = vmatmul.mubr.bf16.gmra.mxu0 %v604
    %v676 = vpop.f32.mrf.mxu0
    %v677 = vadd.f32 0.0, %v676
    %v678 = vpop.f32.mrf.mxu0
    %v679 = vadd.f32 0.0, %v678
    %v680 = vpop.f32.mrf.mxu0
    %v681 = vadd.f32 0.0, %v680
    %v682 = vpop.f32.mrf.mxu0
    %v683 = vadd.f32 0.0, %v682
    %684 = vmatprep.mubr.bf16.mxu0 0
    %685 = vmatmul.mubr.bf16.gmra.mxu0 %v607
    %v686 = vpop.f32.mrf.mxu0
    %v687 = vadd.f32 0.0, %v686
    %v688 = vpop.f32.mrf.mxu0
    %v689 = vadd.f32 0.0, %v688
    %v690 = vpop.f32.mrf.mxu0
    %v691 = vadd.f32 0.0, %v690
    %v692 = vpop.f32.mrf.mxu0
    %v693 = vadd.f32 0.0, %v692
    %694 = vmatprep.mubr.bf16.mxu0 0
    %695 = vmatmul.mubr.bf16.gmra.mxu0 %v610
    %v696 = vpop.f32.mrf.mxu0
    %v697 = vadd.f32 0.0, %v696
    %v698 = vpop.f32.mrf.mxu0
    %v699 = vadd.f32 0.0, %v698
    %v700 = vpop.f32.mrf.mxu0
    %v701 = vadd.f32 0.0, %v700
    %v702 = vpop.f32.mrf.mxu0
    %v703 = vadd.f32 0.0, %v702
    %704 = vmatprep.mubr.bf16.mxu0 0
    %705 = vmatmul.mubr.bf16.gmra.mxu0 %v613
    %v706 = vpop.f32.mrf.mxu0
    %v707 = vadd.f32 0.0, %v706
    %v708 = vpop.f32.mrf.mxu0
    %v709 = vadd.f32 0.0, %v708
    %v710 = vpop.f32.mrf.mxu0
    %v711 = vadd.f32 0.0, %v710
    %v712 = vpop.f32.mrf.mxu0
    %v713 = vadd.f32 0.0, %v712
    %714 = vmatprep.mubr.bf16.mxu0 0
    %715 = vmatmul.mubr.bf16.gmra.mxu0 %v616
    %v716 = vpop.f32.mrf.mxu0
    %v717 = vadd.f32 0.0, %v716
    %v718 = vpop.f32.mrf.mxu0
    %v719 = vadd.f32 0.0, %v718
    %v720 = vpop.f32.mrf.mxu0
    %v721 = vadd.f32 0.0, %v720
    %v722 = vpop.f32.mrf.mxu0
    %v723 = vadd.f32 0.0, %v722
    %724 = vmatprep.mubr.bf16.mxu0 0
    %725 = vmatmul.mubr.bf16.gmra.mxu0 %v619
    %v726 = vpop.f32.mrf.mxu0
    %v727 = vadd.f32 0.0, %v726
    %v728 = vpop.f32.mrf.mxu0
    %v729 = vadd.f32 0.0, %v728
    %v730 = vpop.f32.mrf.mxu0
    %v731 = vadd.f32 0.0, %v730
    %v732 = vpop.f32.mrf.mxu0
    %v733 = vadd.f32 0.0, %v732
    %734 = vmatprep.mubr.bf16.mxu0 0
    %735 = vmatmul.mubr.bf16.gmra.mxu0 %v622
    %v736 = vpop.f32.mrf.mxu0
    %v737 = vadd.f32 0.0, %v736
    %v738 = vpop.f32.mrf.mxu0
    %v739 = vadd.f32 0.0, %v738
    %v740 = vpop.f32.mrf.mxu0
    %v741 = vadd.f32 0.0, %v740
    %v742 = vpop.f32.mrf.mxu0
    %v743 = vadd.f32 0.0, %v742
    %744 = vmatprep.mubr.bf16.mxu0 0
    %745 = vmatmul.mubr.bf16.gmra.mxu0 %v625
    %v746 = vpop.f32.mrf.mxu0
    %v747 = vadd.f32 0.0, %v746
    %v748 = vpop.f32.mrf.mxu0
    %v749 = vadd.f32 0.0, %v748
    %v750 = vpop.f32.mrf.mxu0
    %v751 = vadd.f32 0.0, %v750
    %v752 = vpop.f32.mrf.mxu0
    %v753 = vadd.f32 0.0, %v752
    %754 = vmatprep.mubr.bf16.mxu0 0
    %755 = vmatmul.mubr.bf16.gmra.mxu0 %v628
    %v756 = vpop.f32.mrf.mxu0
    %v757 = vadd.f32 0.0, %v756
    %v758 = vpop.f32.mrf.mxu0
    %v759 = vadd.f32 0.0, %v758
    %v760 = vpop.f32.mrf.mxu0
    %v761 = vadd.f32 0.0, %v760
    %v762 = vpop.f32.mrf.mxu0
    %v763 = vadd.f32 0.0, %v762
    %764 = vmatprep.mubr.bf16.mxu0 0
    %765 = vmatmul.mubr.bf16.gmra.mxu0 %v631
    %v766 = vpop.f32.mrf.mxu0
    %v767 = vadd.f32 0.0, %v766
    %v768 = vpop.f32.mrf.mxu0
    %v769 = vadd.f32 0.0, %v768
    %v770 = vpop.f32.mrf.mxu0
    %v771 = vadd.f32 0.0, %v770
    %v772 = vpop.f32.mrf.mxu0
    %v773 = vadd.f32 0.0, %v772
    %774 = vmatprep.mubr.bf16.mxu0 0
    %775 = vmatmul.mubr.bf16.gmra.mxu0 %v634
    %v776 = vpop.f32.mrf.mxu0
    %v777 = vadd.f32 0.0, %v776
    %v778 = vpop.f32.mrf.mxu0
    %v779 = vadd.f32 0.0, %v778
    %v780 = vpop.f32.mrf.mxu0
    %v781 = vadd.f32 0.0, %v780
    %v782 = vpop.f32.mrf.mxu0
    %v783 = vadd.f32 0.0, %v782
    %784 = vmatprep.mubr.bf16.mxu0 0
    %785 = vmatmul.mubr.bf16.gmra.mxu0 %v637
    %v786 = vpop.f32.mrf.mxu0
    %v787 = vadd.f32 0.0, %v786
    %v788 = vpop.f32.mrf.mxu0
    %v789 = vadd.f32 0.0, %v788
    %v790 = vpop.f32.mrf.mxu0
    %v791 = vadd.f32 0.0, %v790
    %v792 = vpop.f32.mrf.mxu0
    %v793 = vadd.f32 0.0, %v792
    %794 = vmatprep.mubr.bf16.mxu0 0
    %795 = vmatmul.mubr.bf16.gmra.mxu0 %v640
    %v796 = vpop.f32.mrf.mxu0
    %v797 = vadd.f32 0.0, %v796
    %v798 = vpop.f32.mrf.mxu0
    %v799 = vadd.f32 0.0, %v798
    %v800 = vpop.f32.mrf.mxu0
    %v801 = vpop.f32.mrf.mxu0
    %802 = vdwg.mxu0
    %803 = vmatprep.subr.bf16.mxu0 0
    %804 = vmatpush1.bf16.msra.mxu0 0
    %805 = vmatprep.subr.bf16.mxu0 0
    %806 = vmatpush1.bf16.msra.mxu0 0
    %807 = vmatprep.subr.bf16.mxu0 0
    %808 = vmatpush1.bf16.msra.mxu0 0
    %809 = vmatprep.subr.bf16.mxu0 0
    %810 = vmatpush1.bf16.msra.mxu0 0
    %811 = vmatprep.subr.bf16.mxu0 0
    %812 = vmatpush1.bf16.msra.mxu0 0
    %813 = vmatprep.subr.bf16.mxu0 0
    %814 = vmatpush1.bf16.msra.mxu0 0
    %815 = vmatprep.subr.bf16.mxu0 0
    %816 = vmatpush1.bf16.msra.mxu0 0
    %817 = vmatprep.subr.bf16.mxu0 %v602
    %818 = vmatpush1.bf16.msra.mxu0 %v601
    %819 = vmatprep.subr.bf16.mxu0 0
    %820 = vmatpush2.bf16.msra.mxu0 0
    %821 = vmatprep.subr.bf16.mxu0 0
    %822 = vmatpush2.bf16.msra.mxu0 0
    %823 = vmatprep.subr.bf16.mxu0 0
    %824 = vmatpush2.bf16.msra.mxu0 0
    %825 = vmatprep.subr.bf16.mxu0 0
    %826 = vmatpush2.bf16.msra.mxu0 0
    %827 = vmatprep.subr.bf16.mxu0 0
    %828 = vmatpush2.bf16.msra.mxu0 0
    %829 = vmatprep.subr.bf16.mxu0 0
    %830 = vmatpush2.bf16.msra.mxu0 0
    %831 = vmatprep.subr.bf16.mxu0 0
    %832 = vmatpush2.bf16.msra.mxu0 0
    %833 = vmatprep.subr.bf16.mxu0 0
    %834 = vmatpush2.bf16.msra.mxu0 0
    %835 = vmatprep.mubr.bf16.mxu0 0
    %836 = vmatmul.mubr.bf16.gmra.mxu0 %v604
    %v837 = vpop.f32.mrf.mxu0
    %v838 = vadd.f32 0.0, %v837
    %v839 = vpop.f32.mrf.mxu0
    %v840 = vadd.f32 0.0, %v839
    %v841 = vpop.f32.mrf.mxu0
    %v842 = vadd.f32 0.0, %v841
    %v843 = vpop.f32.mrf.mxu0
    %v844 = vadd.f32 0.0, %v843
    %845 = vmatprep.mubr.bf16.mxu0 0
    %846 = vmatmul.mubr.bf16.gmra.mxu0 %v607
    %v847 = vpop.f32.mrf.mxu0
    %v848 = vadd.f32 0.0, %v847
    %v849 = vpop.f32.mrf.mxu0
    %v850 = vadd.f32 0.0, %v849
    %v851 = vpop.f32.mrf.mxu0
    %v852 = vadd.f32 0.0, %v851
    %v853 = vpop.f32.mrf.mxu0
    %v854 = vadd.f32 0.0, %v853
    %855 = vmatprep.mubr.bf16.mxu0 0
    %856 = vmatmul.mubr.bf16.gmra.mxu0 %v610
    %v857 = vpop.f32.mrf.mxu0
    %v858 = vadd.f32 0.0, %v857
    %v859 = vpop.f32.mrf.mxu0
    %v860 = vadd.f32 0.0, %v859
    %v861 = vpop.f32.mrf.mxu0
    %v862 = vadd.f32 0.0, %v861
    %v863 = vpop.f32.mrf.mxu0
    %v864 = vadd.f32 0.0, %v863
    %865 = vmatprep.mubr.bf16.mxu0 0
    %866 = vmatmul.mubr.bf16.gmra.mxu0 %v613
    %v867 = vpop.f32.mrf.mxu0
    %v868 = vadd.f32 0.0, %v867
    %v869 = vpop.f32.mrf.mxu0
    %v870 = vadd.f32 0.0, %v869
    %v871 = vpop.f32.mrf.mxu0
    %v872 = vadd.f32 0.0, %v871
    %v873 = vpop.f32.mrf.mxu0
    %v874 = vadd.f32 0.0, %v873
    %875 = vmatprep.mubr.bf16.mxu0 0
    %876 = vmatmul.mubr.bf16.gmra.mxu0 %v616
    %v877 = vpop.f32.mrf.mxu0
    %v878 = vadd.f32 0.0, %v877
    %v879 = vpop.f32.mrf.mxu0
    %v880 = vadd.f32 0.0, %v879
    %v881 = vpop.f32.mrf.mxu0
    %v882 = vadd.f32 0.0, %v881
    %v883 = vpop.f32.mrf.mxu0
    %v884 = vadd.f32 0.0, %v883
    %885 = vmatprep.mubr.bf16.mxu0 0
    %886 = vmatmul.mubr.bf16.gmra.mxu0 %v619
    %v887 = vpop.f32.mrf.mxu0
    %v888 = vadd.f32 0.0, %v887
    %v889 = vpop.f32.mrf.mxu0
    %v890 = vadd.f32 0.0, %v889
    %v891 = vpop.f32.mrf.mxu0
    %v892 = vadd.f32 0.0, %v891
    %v893 = vpop.f32.mrf.mxu0
    %v894 = vadd.f32 0.0, %v893
    %895 = vmatprep.mubr.bf16.mxu0 0
    %896 = vmatmul.mubr.bf16.gmra.mxu0 %v622
    %v897 = vpop.f32.mrf.mxu0
    %v898 = vadd.f32 0.0, %v897
    %v899 = vpop.f32.mrf.mxu0
    %v900 = vadd.f32 0.0, %v899
    %v901 = vpop.f32.mrf.mxu0
    %v902 = vadd.f32 0.0, %v901
    %v903 = vpop.f32.mrf.mxu0
    %v904 = vadd.f32 0.0, %v903
    %905 = vmatprep.mubr.bf16.mxu0 0
    %906 = vmatmul.mubr.bf16.gmra.mxu0 %v625
    %v907 = vpop.f32.mrf.mxu0
    %v908 = vadd.f32 0.0, %v907
    %v909 = vpop.f32.mrf.mxu0
    %v910 = vadd.f32 0.0, %v909
    %v911 = vpop.f32.mrf.mxu0
    %v912 = vadd.f32 0.0, %v911
    %v913 = vpop.f32.mrf.mxu0
    %v914 = vadd.f32 0.0, %v913
    %915 = vmatprep.mubr.bf16.mxu0 0
    %916 = vmatmul.mubr.bf16.gmra.mxu0 %v628
    %v917 = vpop.f32.mrf.mxu0
    %v918 = vadd.f32 0.0, %v917
    %v919 = vpop.f32.mrf.mxu0
    %v920 = vadd.f32 0.0, %v919
    %v921 = vpop.f32.mrf.mxu0
    %v922 = vadd.f32 0.0, %v921
    %v923 = vpop.f32.mrf.mxu0
    %v924 = vadd.f32 0.0, %v923
    %925 = vmatprep.mubr.bf16.mxu0 0
    %926 = vmatmul.mubr.bf16.gmra.mxu0 %v631
    %v927 = vpop.f32.mrf.mxu0
    %v928 = vadd.f32 0.0, %v927
    %v929 = vpop.f32.mrf.mxu0
    %v930 = vadd.f32 0.0, %v929
    %v931 = vpop.f32.mrf.mxu0
    %v932 = vadd.f32 0.0, %v931
    %v933 = vpop.f32.mrf.mxu0
    %v934 = vadd.f32 0.0, %v933
    %935 = vmatprep.mubr.bf16.mxu0 0
    %936 = vmatmul.mubr.bf16.gmra.mxu0 %v634
    %v937 = vpop.f32.mrf.mxu0
    %v938 = vadd.f32 0.0, %v937
    %v939 = vpop.f32.mrf.mxu0
    %v940 = vadd.f32 0.0, %v939
    %v941 = vpop.f32.mrf.mxu0
    %v942 = vadd.f32 0.0, %v941
    %v943 = vpop.f32.mrf.mxu0
    %v944 = vadd.f32 0.0, %v943
    %945 = vmatprep.mubr.bf16.mxu0 0
    %946 = vmatmul.mubr.bf16.gmra.mxu0 %v637
    %v947 = vpop.f32.mrf.mxu0
    %v948 = vadd.f32 0.0, %v947
    %v949 = vpop.f32.mrf.mxu0
    %v950 = vadd.f32 0.0, %v949
    %v951 = vpop.f32.mrf.mxu0
    %v952 = vadd.f32 0.0, %v951
    %v953 = vpop.f32.mrf.mxu0
    %v954 = vadd.f32 0.0, %v953
    %955 = vmatprep.mubr.bf16.mxu0 0
    %956 = vmatmul.mubr.bf16.gmra.mxu0 %v640
    %v957 = vpop.f32.mrf.mxu0
    %v958 = vadd.f32 0.0, %v957
    %v959 = vpop.f32.mrf.mxu0
    %v960 = vadd.f32 0.0, %v959
    %v961 = vpop.f32.mrf.mxu0
    %v962 = vpop.f32.mrf.mxu0
    %963 = vdwg.mxu0
    %964 = vst [vmem:[#allocation5] sm:$0xff] %v677
    %965 = vst [vmem:[#allocation5 + $0x8] sm:$0xff] %v679
    %966 = vst [vmem:[#allocation5 + $0x10] sm:$0xff] %v838
    %967 = vst [vmem:[#allocation5 + $0x18] sm:$0xff] %v840
    %968 = vst [vmem:[#allocation5 + $0x20] sm:$0xff] %v681
    %969 = vst [vmem:[#allocation5 + $0x28] sm:$0xff] %v683
    %970 = vst [vmem:[#allocation5 + $0x30] sm:$0xff] %v842
    %971 = vst [vmem:[#allocation5 + $0x38] sm:$0xff] %v844
    %972 = vst [vmem:[#allocation5 + $0x40] sm:$0xff] %v687
    %973 = vst [vmem:[#allocation5 + $0x48] sm:$0xff] %v689
    %974 = vst [vmem:[#allocation5 + $0x50] sm:$0xff] %v848
    %975 = vst [vmem:[#allocation5 + $0x58] sm:$0xff] %v850
    %976 = vst [vmem:[#allocation5 + $0x60] sm:$0xff] %v691
    %977 = vst [vmem:[#allocation5 + $0x68] sm:$0xff] %v693
    %978 = vst [vmem:[#allocation5 + $0x70] sm:$0xff] %v852
    %979 = vst [vmem:[#allocation5 + $0x78] sm:$0xff] %v854
    %980 = vst [vmem:[#allocation5 + $0x80] sm:$0xff] %v697
    %981 = vst [vmem:[#allocation5 + $0x88] sm:$0xff] %v699
    %982 = vst [vmem:[#allocation5 + $0x90] sm:$0xff] %v858
    %983 = vst [vmem:[#allocation5 + $0x98] sm:$0xff] %v860
    %984 = vst [vmem:[#allocation5 + $0xa0] sm:$0xff] %v701
    %985 = vst [vmem:[#allocation5 + $0xa8] sm:$0xff] %v703
    %986 = vst [vmem:[#allocation5 + $0xb0] sm:$0xff] %v862
    %987 = vst [vmem:[#allocation5 + $0xb8] sm:$0xff] %v864
    %988 = vst [vmem:[#allocation5 + $0xc0] sm:$0xff] %v707
    %989 = vst [vmem:[#allocation5 + $0xc8] sm:$0xff] %v709
    %990 = vst [vmem:[#allocation5 + $0xd0] sm:$0xff] %v868
    %991 = vst [vmem:[#allocation5 + $0xd8] sm:$0xff] %v870
    %992 = vst [vmem:[#allocation5 + $0xe0] sm:$0xff] %v711
    %993 = vst [vmem:[#allocation5 + $0xe8] sm:$0xff] %v713
    %994 = vst [vmem:[#allocation5 + $0xf0] sm:$0xff] %v872
    %995 = vst [vmem:[#allocation5 + $0xf8] sm:$0xff] %v874
    %996 = vst [vmem:[#allocation5 + $0x100] sm:$0xff] %v717
    %997 = vst [vmem:[#allocation5 + $0x108] sm:$0xff] %v719
    %998 = vst [vmem:[#allocation5 + $0x110] sm:$0xff] %v878
    %999 = vst [vmem:[#allocation5 + $0x118] sm:$0xff] %v880
    %1000 = vst [vmem:[#allocation5 + $0x120] sm:$0xff] %v721
    %1001 = vst [vmem:[#allocation5 + $0x128] sm:$0xff] %v723
    %1002 = vst [vmem:[#allocation5 + $0x130] sm:$0xff] %v882
    %1003 = vst [vmem:[#allocation5 + $0x138] sm:$0xff] %v884
    %1004 = vst [vmem:[#allocation5 + $0x140] sm:$0xff] %v727
    %1005 = vst [vmem:[#allocation5 + $0x148] sm:$0xff] %v729
    %1006 = vst [vmem:[#allocation5 + $0x150] sm:$0xff] %v888
    %1007 = vst [vmem:[#allocation5 + $0x158] sm:$0xff] %v890
    %1008 = vst [vmem:[#allocation5 + $0x160] sm:$0xff] %v731
    %1009 = vst [vmem:[#allocation5 + $0x168] sm:$0xff] %v733
    %1010 = vst [vmem:[#allocation5 + $0x170] sm:$0xff] %v892
    %1011 = vst [vmem:[#allocation5 + $0x178] sm:$0xff] %v894
    %1012 = vst [vmem:[#allocation5 + $0x180] sm:$0xff] %v737
    %1013 = vst [vmem:[#allocation5 + $0x188] sm:$0xff] %v739
    %1014 = vst [vmem:[#allocation5 + $0x190] sm:$0xff] %v898
    %1015 = vst [vmem:[#allocation5 + $0x198] sm:$0xff] %v900
    %1016 = vst [vmem:[#allocation5 + $0x1a0] sm:$0xff] %v741
    %1017 = vst [vmem:[#allocation5 + $0x1a8] sm:$0xff] %v743
    %1018 = vst [vmem:[#allocation5 + $0x1b0] sm:$0xff] %v902
    %1019 = vst [vmem:[#allocation5 + $0x1b8] sm:$0xff] %v904
    %1020 = vst [vmem:[#allocation5 + $0x1c0] sm:$0xff] %v747
    %1021 = vst [vmem:[#allocation5 + $0x1c8] sm:$0xff] %v749
    %1022 = vst [vmem:[#allocation5 + $0x1d0] sm:$0xff] %v908
    %1023 = vst [vmem:[#allocation5 + $0x1d8] sm:$0xff] %v910
    %1024 = vst [vmem:[#allocation5 + $0x1e0] sm:$0xff] %v751
    %1025 = vst [vmem:[#allocation5 + $0x1e8] sm:$0xff] %v753
    %1026 = vst [vmem:[#allocation5 + $0x1f0] sm:$0xff] %v912
    %1027 = vst [vmem:[#allocation5 + $0x1f8] sm:$0xff] %v914
    %1028 = vst [vmem:[#allocation5 + $0x200] sm:$0xff] %v757
    %1029 = vst [vmem:[#allocation5 + $0x208] sm:$0xff] %v759
    %1030 = vst [vmem:[#allocation5 + $0x210] sm:$0xff] %v918
    %1031 = vst [vmem:[#allocation5 + $0x218] sm:$0xff] %v920
    %1032 = vst [vmem:[#allocation5 + $0x220] sm:$0xff] %v761
    %1033 = vst [vmem:[#allocation5 + $0x228] sm:$0xff] %v763
    %1034 = vst [vmem:[#allocation5 + $0x230] sm:$0xff] %v922
    %1035 = vst [vmem:[#allocation5 + $0x238] sm:$0xff] %v924
    %1036 = vst [vmem:[#allocation5 + $0x240] sm:$0xff] %v767
    %1037 = vst [vmem:[#allocation5 + $0x248] sm:$0xff] %v769
    %1038 = vst [vmem:[#allocation5 + $0x250] sm:$0xff] %v928
    %1039 = vst [vmem:[#allocation5 + $0x258] sm:$0xff] %v930
    %1040 = vst [vmem:[#allocation5 + $0x260] sm:$0xff] %v771
    %1041 = vst [vmem:[#allocation5 + $0x268] sm:$0xff] %v773
    %1042 = vst [vmem:[#allocation5 + $0x270] sm:$0xff] %v932
    %1043 = vst [vmem:[#allocation5 + $0x278] sm:$0xff] %v934
    %1044 = vst [vmem:[#allocation5 + $0x280] sm:$0xff] %v777
    %1045 = vst [vmem:[#allocation5 + $0x288] sm:$0xff] %v779
    %1046 = vst [vmem:[#allocation5 + $0x290] sm:$0xff] %v938
    %1047 = vst [vmem:[#allocation5 + $0x298] sm:$0xff] %v940
    %1048 = vst [vmem:[#allocation5 + $0x2a0] sm:$0xff] %v781
    %1049 = vst [vmem:[#allocation5 + $0x2a8] sm:$0xff] %v783
    %1050 = vst [vmem:[#allocation5 + $0x2b0] sm:$0xff] %v942
    %1051 = vst [vmem:[#allocation5 + $0x2b8] sm:$0xff] %v944
    %1052 = vst [vmem:[#allocation5 + $0x2c0] sm:$0xff] %v787
    %1053 = vst [vmem:[#allocation5 + $0x2c8] sm:$0xff] %v789
    %1054 = vst [vmem:[#allocation5 + $0x2d0] sm:$0xff] %v948
    %1055 = vst [vmem:[#allocation5 + $0x2d8] sm:$0xff] %v950
    %1056 = vst [vmem:[#allocation5 + $0x2e0] sm:$0xff] %v791
    %1057 = vst [vmem:[#allocation5 + $0x2e8] sm:$0xff] %v793
    %1058 = vst [vmem:[#allocation5 + $0x2f0] sm:$0xff] %v952
    %1059 = vst [vmem:[#allocation5 + $0x2f8] sm:$0xff] %v954
    %1060 = vst [vmem:[#allocation5 + $0x300] sm:$0xff] %v797
    %1061 = vst [vmem:[#allocation5 + $0x308] sm:$0xff] %v799
    %1062 = vst [vmem:[#allocation5 + $0x310] sm:$0xff] %v958
    %1063 = vst [vmem:[#allocation5 + $0x318] sm:$0xff] %v960
    // Predicated region
    $region18: #{tpu_custom_call.1} parent=1 // pred_check
      _
    $region19: #{tpu_custom_call.1} parent=1 // pred_check_branch
      %1065 = sbr.rel (0) target = $region21
    $region20: #{tpu_custom_call.1} parent=1 // pred_region
      _
    $region21: #{tpu_custom_call.1} parent=1 // pred_fallthru
      _
    // Predicated region
    $region22: #{tpu_custom_call.1} parent=1 // pred_check
      _
    $region23: #{tpu_custom_call.1} parent=1 // pred_check_branch
      %1067 = sbr.rel (0) target = $region25
    $region24: #{tpu_custom_call.1} parent=1 // pred_region
      %s1069 = ssub.s32 12800, 12800
      %1070 = vsyncadd [#allocation4], %s1069
      %s1071 = sshll.u32 [#allocation5], 4
      %s1072 = int_to_ptr.vmem [resolvable:$true] %s1071
      %1077 = dma.vmem_to_hbm [thread:$0]  %s1072, 12800, %s4, [#allocation4], 512, 512, 32
    $region25: #{tpu_custom_call.1} parent=1 // pred_fallthru
      _
    // Predicated region
    $region26: #{tpu_custom_call.1} parent=1 // pred_check
      _
    $region27: #{tpu_custom_call.1} parent=1 // pred_check_branch
      %1079 = sbr.rel (0) target = $region29
    $region28: #{tpu_custom_call.1} parent=1 // pred_region
      _
    $region29: #{tpu_custom_call.1} parent=1 // pred_fallthru
      _
    // Predicated region
    $region30: #{tpu_custom_call.1} parent=1 // pred_check
      _
    $region31: #{tpu_custom_call.1} parent=1 // pred_check_branch
      %1081 = sbr.rel (0) target = $region33
    $region32: #{tpu_custom_call.1} parent=1 // pred_region
      %1082 = dma.done [#allocation4], 12800
    $region33: #{tpu_custom_call.1} parent=1 // pred_fallthru
      _
    %1083 = vsyncpa [#allocation3], 1
    %1084 = vsyncpa [#allocation4], 1

</llo_original>
